<compile_context>
chip_gen: v7x
topology: tpu7x:2x2x1
jax: 0.10.0
libtpu: 0.0.40
codegen_flags: <defaults>
</compile_context>

<pallas_src>
import functools

import jax
import jax.numpy as jnp
from jax import lax
from jax.experimental import pallas as pl
from jax.experimental.pallas import tpu as pltpu

EPS = 1e-5


def _fme_kernel(xbig_ref, xf_ref, wbig_ref, out_ref, *, n_b, c, h, w_sp):
    """Gridless body; all operands resident in VMEM.

    xbig_ref : (9C, L)      3-tap stacked feature vectors, L = N*H (batch on lanes)
    xf_ref   : (N, 3C, HW)  flat activations, streams stacked on the channel axis
    wbig_ref : (3C, 9C)     fused block-diagonal Conv1d weight (all 3 streams)
    out_ref  : (N, 3C, HW)  relu(bn2d(x)) + broadcast cross-stream exchange maps
    """
    c3 = 3 * c
    hw = h * w_sp
    l_len = n_b * h
    total2d = n_b * hw
    f32 = jnp.float32

    # ---- 1D path: ONE fused MXU matmul for all 3 streams / 3 taps / batches.
    y = jnp.dot(wbig_ref[...], xbig_ref[...], preferred_element_type=f32)   # (3C, L)

    # Conv1d bias omitted: a per-channel constant cancels exactly under
    # train-mode BatchNorm1d.  BN1d (train): biased stats over (batch, length),
    # two-pass (centered) for numerical safety.  All math stays in f32.
    mean1 = jnp.sum(y, axis=1, keepdims=True) / l_len
    d1 = y - mean1
    var1 = jnp.sum(d1 * d1, axis=1, keepdims=True) / l_len
    m = jnp.maximum(d1 * lax.rsqrt(var1 + EPS), 0.0)                        # (3C, L)

    # Cross-stream exchange maps, stream-stacked:  add_s = (m_u+m_v+m_w) - m_s.
    tot = m[0:c] + m[c:2 * c] + m[2 * c:c3]                                 # (C, L)
    adds = jnp.concatenate([tot, tot, tot], axis=0) - m                     # (3C, L)

    # Per-batch broadcaster along W (block-diagonal structure of the old
    # (N*H, N*H*W) matrix exploited: one shared (H, HW) block, built from iota
    # in-kernel so it never costs HBM bytes).  bcast[i, j] = 1 iff j // W == i.
    row = lax.broadcasted_iota(jnp.int32, (h, hw), 0)
    col = lax.broadcasted_iota(jnp.int32, (h, hw), 1)
    lo = row * w_sp
    bcast = jnp.where((col >= lo) & (col < lo + w_sp), 1.0, 0.0).astype(f32)

    # ---- 2D path: train-mode BatchNorm2d (+ReLU) on the stream-stacked slabs.
    slabs = [xf_ref[n] for n in range(n_b)]                                 # (3C, HW) each
    s1 = sum(jnp.sum(s, axis=1, keepdims=True) for s in slabs)
    mean2 = s1 / total2d                                                    # (3C, 1)
    s2 = sum(jnp.sum((s - mean2) * (s - mean2), axis=1, keepdims=True) for s in slabs)
    inv2 = lax.rsqrt(s2 / total2d + EPS)                                    # (3C, 1)

    for n in range(n_b):
        # One (3C, H) @ (H, HW) MXU push broadcasts all 3 streams' maps along W.
        add_full = jnp.dot(adds[:, n * h:(n + 1) * h], bcast,
                           preferred_element_type=f32)                      # (3C, HW)
        out_ref[n] = jnp.maximum((slabs[n] - mean2) * inv2, 0.0) + add_full


def feature_map_exchange(u, v, w, wu, bu, wv, bv, ww, bw):
    """u, v, w: (N, C, H, W) f32 NCHW.  wX: (C, C, 3) torch Conv1d weights.
    bX: Conv1d biases -- accepted for parameter parity with the module but not
    used (a per-channel constant cancels exactly under train-mode BN1d)."""
    del bu, bv, bw
    n_b, c, h, w_sp = u.shape
    assert h == w_sp, "exchange-map broadcast requires H == W (numZ)"
    hw = h * w_sp
    l_len = n_b * h
    c3 = 3 * c
    f32 = jnp.float32

    u, v, w = (t.astype(f32) for t in (u, v, w))

    # Stacked flat activations: (N, 3C, HW), streams on the channel axis.
    xf = jnp.concatenate([u, v, w], axis=1).reshape(n_b, c3, hw)

    # 3-tap stacked feature-vector operand for the fused Conv1d matmul.
    # Lane j = n*H + h (batch folded on lanes).  The +-1 tap shifts are pure
    # layout, done here once (shift + explicit zero fill) so the kernel does no
    # scratch assembly: the conv zero-padding columns (h==0 for tap k=0,
    # h==H-1 for tap k=2) AND the cross-batch boundary columns are zeroed.
    def fold(t):                                   # (N, C, H, W) -> (C, N*H)
        return jnp.max(t, axis=3).transpose(1, 0, 2).reshape(c, l_len)

    fvs = jnp.concatenate([fold(u), fold(v), fold(w)], axis=0)              # (3C, L)
    hpos = (jnp.arange(l_len) % h)[None, :]
    zcol = jnp.zeros((c3, 1), f32)
    t0 = jnp.where(hpos != 0, jnp.concatenate([zcol, fvs[:, :-1]], axis=1), 0.0)
    t2 = jnp.where(hpos != h - 1, jnp.concatenate([fvs[:, 1:], zcol], axis=1), 0.0)
    xbig = jnp.concatenate([t0, fvs, t2], axis=0)                           # (9C, L)

    # Fused conv weight: for each tap k a (3C, 3C) block-diagonal of the three
    # streams' (C, C) slices, concatenated along the contraction axis.
    zc = jnp.zeros((c, c), f32)

    def blkdiag(a, b, d):
        return jnp.concatenate([
            jnp.concatenate([a, zc, zc], axis=1),
            jnp.concatenate([zc, b, zc], axis=1),
            jnp.concatenate([zc, zc, d], axis=1)], axis=0)

    wu, wv, ww = (t.astype(f32) for t in (wu, wv, ww))
    wbig = jnp.concatenate([blkdiag(wu[:, :, k], wv[:, :, k], ww[:, :, k])
                            for k in range(3)], axis=1)                     # (3C, 9C)

    vmem = pl.BlockSpec(memory_space=pltpu.MemorySpace.VMEM)
    out_sds = jax.ShapeDtypeStruct((n_b, c3, hw), f32)

    cost = pl.CostEstimate(
        flops=2 * c3 * (3 * c3) * l_len            # fused conv matmul
              + n_b * 2 * c3 * h * hw              # per-batch broadcast matmuls
              + 14 * n_b * c3 * hw,                # BN / ReLU / add elementwise
        transcendentals=2 * c3,                    # rsqrt: BN1d + BN2d
        bytes_accessed=4 * (xbig.size + wbig.size + 2 * n_b * c3 * hw),
    )

    kernel = functools.partial(_fme_kernel, n_b=n_b, c=c, h=h, w_sp=w_sp)

    # TODO(synk): for production-size inputs add a grid over N (or the 3
    # streams) with dimension_semantics=("parallel",) so v7x's two TensorCores
    # are used, and re-budget VMEM (64 MiB physical / 32 MiB scoped on v7x).
    # TODO(synk): on v6e with larger C, cast wbig/xbig to bf16 for the conv
    # matmul (BN1d renormalizes right after); keep the broadcast matmul and
    # all BN math in f32.
    out = pl.pallas_call(
        kernel,
        out_shape=out_sds,
        in_specs=[vmem, vmem, vmem],
        out_specs=vmem,
        cost_estimate=cost,
    )(xbig, xf, wbig)

    out = out.reshape(n_b, 3, c, h, w_sp)
    return out[:, 0], out[:, 1], out[:, 2]


# ----------------------------- pure-JAX reference -----------------------------
def reference(u, v, w, wu, bu, wv, bv, ww, bw):
    def conv1d(x, wt, b):
        y = lax.conv_general_dilated(x, wt, window_strides=(1,), padding=((1, 1),),
                                     dimension_numbers=("NCH", "OIH", "NCH"))
        return y + b[None, :, None]

    def bn(x, axes):
        m = jnp.mean(x, axis=axes, keepdims=True)
        var = jnp.mean((x - m) ** 2, axis=axes, keepdims=True)
        return (x - m) * lax.rsqrt(var + EPS)

    relu = lambda t: jnp.maximum(t, 0.0)

    def fmap(x, wt, b):
        return relu(bn(conv1d(jnp.max(x, axis=3), wt, b), (0, 2)))

    um, vm, wm = fmap(u, wu, bu), fmap(v, wv, bv), fmap(w, ww, bw)
    ub, vb, wb = relu(bn(u, (0, 2, 3))), relu(bn(v, (0, 2, 3))), relu(bn(w, (0, 2, 3)))
    uo = ub + (vm + wm)[..., None]
    vo = vb + (wm + um)[..., None]
    wo = wb + (um + vm)[..., None]
    return uo, vo, wo


if __name__ == "__main__":
    key = jax.random.PRNGKey(0)
    N, C, H, W = 2, 4, 16, 16        # in_planes = out_planes = C (required by forward)
    ks = jax.random.split(key, 6)

    u = jax.random.normal(ks[0], (N, C, H, W), jnp.float32)
    v = jax.random.normal(ks[1], (N, C, H, W), jnp.float32)
    w = jax.random.normal(ks[2], (N, C, H, W), jnp.float32)

    bound = 1.0 / (C * 3) ** 0.5     # PyTorch Conv1d default init bound

    def init_conv(k):
        kw, kb = jax.random.split(k)
        wt = jax.random.uniform(kw, (C, C, 3), jnp.float32, -bound, bound)
        b = jax.random.uniform(kb, (C,), jnp.float32, -bound, bound)
        return wt, b

    wu_t, bu = init_conv(ks[3])
    wv_t, bv = init_conv(ks[4])
    ww_t, bw = init_conv(ks[5])
    # conv3x3 weights exist in __init__ but their forward outputs are discarded.

    out = feature_map_exchange(u, v, w, wu_t, bu, wv_t, bv, ww_t, bw)
    out = jax.block_until_ready(out)

    ref = reference(u, v, w, wu_t, bu, wv_t, bv, ww_t, bw)
    for o, r in zip(out, ref):
        err = float(jnp.max(jnp.abs(o - r)))
        assert o.shape == r.shape and err < 1e-3, f"mismatch, max abs err = {err}"

    print("KERNEL_OK")
</pallas_src>

<mosaic_0001>
module attributes {stable_mosaic.version = 11 : i64} {
  func.func @_fme_kernel(%arg0: memref<36x32xf32, #tpu.memory_space<vmem>>, %arg1: memref<2x12x256xf32, #tpu.memory_space<vmem>>, %arg2: memref<12x36xf32, #tpu.memory_space<vmem>>, %arg3: memref<2x12x256xf32, #tpu.memory_space<vmem>>) attributes {dimension_semantics = [], scalar_prefetch = 0 : i64, scratch_operands = 0 : i64, tpu.core_type = #tpu.core_type<tc>} {
    %c0 = arith.constant 0 : index
    %c0_0 = arith.constant 0 : index
    %0 = vector.load %arg2[%c0, %c0_0] : memref<12x36xf32, #tpu.memory_space<vmem>>, vector<12x36xf32>
    %c0_1 = arith.constant 0 : index
    %c0_2 = arith.constant 0 : index
    %1 = vector.load %arg0[%c0_1, %c0_2] : memref<36x32xf32, #tpu.memory_space<vmem>>, vector<36x32xf32>
    %cst = arith.constant dense<0.000000e+00> : vector<12x32xf32>
    %2 = tpu.matmul %0, %1, %cst {dimension_numbers = #tpu.dot_dimension_numbers<[1], [0], [0], [1], [0, 0, 1, 1], [], []>} : vector<12x36xf32>, vector<36x32xf32>, vector<12x32xf32> -> vector<12x32xf32>
    %cst_3 = arith.constant dense<0.000000e+00> : vector<12xf32>
    %3 = vector.multi_reduction <add>, %2, %cst_3 [1] : vector<12x32xf32> to vector<12xf32>
    %4 = vector.shape_cast %3 : vector<12xf32> to vector<12x1xf32>
    %cst_4 = arith.constant 3.200000e+01 : f32
    %5 = vector.broadcast %cst_4 : f32 to vector<12x1xf32>
    %6 = arith.divf %4, %5 : vector<12x1xf32>
    %7 = vector.broadcast %6 : vector<12x1xf32> to vector<12x32xf32>
    %8 = arith.subf %2, %7 : vector<12x32xf32>
    %9 = arith.mulf %8, %8 : vector<12x32xf32>
    %cst_5 = arith.constant dense<0.000000e+00> : vector<12xf32>
    %10 = vector.multi_reduction <add>, %9, %cst_5 [1] : vector<12x32xf32> to vector<12xf32>
    %11 = vector.shape_cast %10 : vector<12xf32> to vector<12x1xf32>
    %cst_6 = arith.constant 3.200000e+01 : f32
    %12 = vector.broadcast %cst_6 : f32 to vector<12x1xf32>
    %13 = arith.divf %11, %12 : vector<12x1xf32>
    %cst_7 = arith.constant 9.99999974E-6 : f32
    %14 = vector.broadcast %cst_7 : f32 to vector<12x1xf32>
    %15 = arith.addf %13, %14 : vector<12x1xf32>
    %16 = math.rsqrt %15 : vector<12x1xf32>
    %17 = vector.broadcast %16 : vector<12x1xf32> to vector<12x32xf32>
    %18 = arith.mulf %8, %17 : vector<12x32xf32>
    %cst_8 = arith.constant 0.000000e+00 : f32
    %19 = vector.broadcast %cst_8 : f32 to vector<12x32xf32>
    %20 = arith.maximumf %18, %19 : vector<12x32xf32>
    %21 = vector.extract_strided_slice %20 {offsets = [0, 0], sizes = [4, 32], strides = [1, 1]} : vector<12x32xf32> to vector<4x32xf32>
    %22 = vector.extract_strided_slice %20 {offsets = [4, 0], sizes = [4, 32], strides = [1, 1]} : vector<12x32xf32> to vector<4x32xf32>
    %23 = arith.addf %21, %22 : vector<4x32xf32>
    %24 = vector.extract_strided_slice %20 {offsets = [8, 0], sizes = [4, 32], strides = [1, 1]} : vector<12x32xf32> to vector<4x32xf32>
    %25 = arith.addf %23, %24 : vector<4x32xf32>
    %26 = tpu.concatenate %25, %25, %25 in 0 : vector<4x32xf32>, vector<4x32xf32>, vector<4x32xf32> -> vector<12x32xf32>
    %27 = arith.subf %26, %20 : vector<12x32xf32>
    %28 = tpu.iota {dimensions = array<i32: 0>} : vector<16x256xi32>
    %29 = tpu.iota {dimensions = array<i32: 1>} : vector<16x256xi32>
    %c16_i32 = arith.constant 16 : i32
    %30 = vector.broadcast %c16_i32 : i32 to vector<16x256xi32>
    %31 = arith.muli %28, %30 : vector<16x256xi32>
    %32 = arith.cmpi sge, %29, %31 : vector<16x256xi32>
    %c16_i32_9 = arith.constant 16 : i32
    %33 = vector.broadcast %c16_i32_9 : i32 to vector<16x256xi32>
    %34 = arith.addi %31, %33 : vector<16x256xi32>
    %35 = arith.cmpi slt, %29, %34 : vector<16x256xi32>
    %36 = arith.andi %32, %35 : vector<16x256xi1>
    %cst_10 = arith.constant 1.000000e+00 : f32
    %cst_11 = arith.constant 0.000000e+00 : f32
    %37 = vector.broadcast %cst_10 : f32 to vector<16x256xf32>
    %38 = vector.broadcast %cst_11 : f32 to vector<16x256xf32>
    %39 = arith.select %36, %37, %38 : vector<16x256xi1>, vector<16x256xf32>
    %c0_12 = arith.constant 0 : index
    %c0_13 = arith.constant 0 : index
    %c0_14 = arith.constant 0 : index
    %40 = vector.load %arg1[%c0_12, %c0_13, %c0_14] : memref<2x12x256xf32, #tpu.memory_space<vmem>>, vector<1x12x256xf32>
    %41 = vector.shape_cast %40 : vector<1x12x256xf32> to vector<12x256xf32>
    %c1 = arith.constant 1 : index
    %c0_15 = arith.constant 0 : index
    %c0_16 = arith.constant 0 : index
    %42 = vector.load %arg1[%c1, %c0_15, %c0_16] : memref<2x12x256xf32, #tpu.memory_space<vmem>>, vector<1x12x256xf32>
    %43 = vector.shape_cast %42 : vector<1x12x256xf32> to vector<12x256xf32>
    %cst_17 = arith.constant dense<0.000000e+00> : vector<12xf32>
    %44 = vector.multi_reduction <add>, %41, %cst_17 [1] : vector<12x256xf32> to vector<12xf32>
    %45 = vector.shape_cast %44 : vector<12xf32> to vector<12x1xf32>
    %cst_18 = arith.constant 0.000000e+00 : f32
    %46 = vector.broadcast %cst_18 : f32 to vector<12x1xf32>
    %47 = arith.addf %46, %45 : vector<12x1xf32>
    %cst_19 = arith.constant dense<0.000000e+00> : vector<12xf32>
    %48 = vector.multi_reduction <add>, %43, %cst_19 [1] : vector<12x256xf32> to vector<12xf32>
    %49 = vector.shape_cast %48 : vector<12xf32> to vector<12x1xf32>
    %50 = arith.addf %47, %49 : vector<12x1xf32>
    %cst_20 = arith.constant 5.120000e+02 : f32
    %51 = vector.broadcast %cst_20 : f32 to vector<12x1xf32>
    %52 = arith.divf %50, %51 : vector<12x1xf32>
    %53 = vector.broadcast %52 : vector<12x1xf32> to vector<12x256xf32>
    %54 = arith.subf %41, %53 : vector<12x256xf32>
    %55 = vector.broadcast %52 : vector<12x1xf32> to vector<12x256xf32>
    %56 = arith.subf %41, %55 : vector<12x256xf32>
    %57 = arith.mulf %54, %56 : vector<12x256xf32>
    %cst_21 = arith.constant dense<0.000000e+00> : vector<12xf32>
    %58 = vector.multi_reduction <add>, %57, %cst_21 [1] : vector<12x256xf32> to vector<12xf32>
    %59 = vector.shape_cast %58 : vector<12xf32> to vector<12x1xf32>
    %cst_22 = arith.constant 0.000000e+00 : f32
    %60 = vector.broadcast %cst_22 : f32 to vector<12x1xf32>
    %61 = arith.addf %60, %59 : vector<12x1xf32>
    %62 = vector.broadcast %52 : vector<12x1xf32> to vector<12x256xf32>
    %63 = arith.subf %43, %62 : vector<12x256xf32>
    %64 = vector.broadcast %52 : vector<12x1xf32> to vector<12x256xf32>
    %65 = arith.subf %43, %64 : vector<12x256xf32>
    %66 = arith.mulf %63, %65 : vector<12x256xf32>
    %cst_23 = arith.constant dense<0.000000e+00> : vector<12xf32>
    %67 = vector.multi_reduction <add>, %66, %cst_23 [1] : vector<12x256xf32> to vector<12xf32>
    %68 = vector.shape_cast %67 : vector<12xf32> to vector<12x1xf32>
    %69 = arith.addf %61, %68 : vector<12x1xf32>
    %cst_24 = arith.constant 5.120000e+02 : f32
    %70 = vector.broadcast %cst_24 : f32 to vector<12x1xf32>
    %71 = arith.divf %69, %70 : vector<12x1xf32>
    %cst_25 = arith.constant 9.99999974E-6 : f32
    %72 = vector.broadcast %cst_25 : f32 to vector<12x1xf32>
    %73 = arith.addf %71, %72 : vector<12x1xf32>
    %74 = math.rsqrt %73 : vector<12x1xf32>
    %75 = vector.extract_strided_slice %27 {offsets = [0, 0], sizes = [12, 16], strides = [1, 1]} : vector<12x32xf32> to vector<12x16xf32>
    %cst_26 = arith.constant dense<0.000000e+00> : vector<12x256xf32>
    %76 = tpu.matmul %75, %39, %cst_26 {dimension_numbers = #tpu.dot_dimension_numbers<[1], [0], [0], [1], [0, 0, 1, 1], [], []>} : vector<12x16xf32>, vector<16x256xf32>, vector<12x256xf32> -> vector<12x256xf32>
    %77 = vector.broadcast %52 : vector<12x1xf32> to vector<12x256xf32>
    %78 = arith.subf %41, %77 : vector<12x256xf32>
    %79 = vector.broadcast %74 : vector<12x1xf32> to vector<12x256xf32>
    %80 = arith.mulf %78, %79 : vector<12x256xf32>
    %cst_27 = arith.constant 0.000000e+00 : f32
    %81 = vector.broadcast %cst_27 : f32 to vector<12x256xf32>
    %82 = arith.maximumf %80, %81 : vector<12x256xf32>
    %83 = arith.addf %82, %76 : vector<12x256xf32>
    %c0_28 = arith.constant 0 : index
    %c0_29 = arith.constant 0 : index
    %c0_30 = arith.constant 0 : index
    %84 = vector.load %arg3[%c0_28, %c0_29, %c0_30] : memref<2x12x256xf32, #tpu.memory_space<vmem>>, vector<1x12x256xf32>
    %85 = vector.shape_cast %84 : vector<1x12x256xf32> to vector<12x256xf32>
    %86 = vector.shape_cast %83 : vector<12x256xf32> to vector<1x12x256xf32>
    tpu.vector_store %arg3[%c0_28, %c0_29, %c0_30], %86 {strides = array<i32>} : memref<2x12x256xf32, #tpu.memory_space<vmem>>, vector<1x12x256xf32>,
    %87 = vector.extract_strided_slice %27 {offsets = [0, 16], sizes = [12, 16], strides = [1, 1]} : vector<12x32xf32> to vector<12x16xf32>
    %cst_31 = arith.constant dense<0.000000e+00> : vector<12x256xf32>
    %88 = tpu.matmul %87, %39, %cst_31 {dimension_numbers = #tpu.dot_dimension_numbers<[1], [0], [0], [1], [0, 0, 1, 1], [], []>} : vector<12x16xf32>, vector<16x256xf32>, vector<12x256xf32> -> vector<12x256xf32>
    %89 = vector.broadcast %52 : vector<12x1xf32> to vector<12x256xf32>
    %90 = arith.subf %43, %89 : vector<12x256xf32>
    %91 = vector.broadcast %74 : vector<12x1xf32> to vector<12x256xf32>
    %92 = arith.mulf %90, %91 : vector<12x256xf32>
    %cst_32 = arith.constant 0.000000e+00 : f32
    %93 = vector.broadcast %cst_32 : f32 to vector<12x256xf32>
    %94 = arith.maximumf %92, %93 : vector<12x256xf32>
    %95 = arith.addf %94, %88 : vector<12x256xf32>
    %c1_33 = arith.constant 1 : index
    %c0_34 = arith.constant 0 : index
    %c0_35 = arith.constant 0 : index
    %96 = vector.load %arg3[%c1_33, %c0_34, %c0_35] : memref<2x12x256xf32, #tpu.memory_space<vmem>>, vector<1x12x256xf32>
    %97 = vector.shape_cast %96 : vector<1x12x256xf32> to vector<12x256xf32>
    %98 = vector.shape_cast %95 : vector<12x256xf32> to vector<1x12x256xf32>
    tpu.vector_store %arg3[%c1_33, %c0_34, %c0_35], %98 {strides = array<i32>} : memref<2x12x256xf32, #tpu.memory_space<vmem>>, vector<1x12x256xf32>,
    return
  }
}

</mosaic_0001>

<llo_original>
// kernel: tpu_custom_call.1
$region0: #{tpu_custom_call.1}
  #allocation0 [shape = 'u32[]', space=smem, size = 0x4, offset = 0x4, fixed_abs, tag = 'smem constant byte address 0x4 - core index']
  #allocation1 [shape = 'u32[144,128]{1,0:T(1,128)}', space=vmem, size = 0x12000, scoped, tag = 'internal scratch']
  %s0 = inlined_call_operand.vmem [shape: f32[36,32], index: 0, kind: input, shape index: {}]
  %s1 = inlined_call_operand.vmem [shape: f32[2,12,256], index: 1, kind: input, shape index: {}]
  %s2 = inlined_call_operand.vmem [shape: f32[12,36], index: 2, kind: input, shape index: {}]
  %s3 = inlined_call_operand.vmem [shape: f32[2,12,256], index: 3, kind: output, shape index: {}]
  %s4 = sld [smem:[#allocation0]]
  $region22: #{tpu_custom_call.1} parent=0
    _
  %s6 = ssub.s32 1, %s4
  %s7 = scalar_select 0, %s6, %s4
  // Predicated region
  $region2: #{tpu_custom_call.1} parent=0 // pred_check
    _
  $region3: #{tpu_custom_call.1} parent=0 // pred_check_branch
    %9 = sbr.rel (0) target = $region5
  $region4: #{tpu_custom_call.1} parent=0 // pred_region
    _
  $region5: #{tpu_custom_call.1} parent=0 // pred_fallthru
    _
  // Predicated region
  $region6: #{tpu_custom_call.1} parent=0 // pred_check
    _
  $region7: #{tpu_custom_call.1} parent=0 // pred_check_branch
    %11 = sbr.rel (0) target = $region9
  $region8: #{tpu_custom_call.1} parent=0 // pred_region
    _
  $region9: #{tpu_custom_call.1} parent=0 // pred_fallthru
    _
  // Predicated region
  $region10: #{tpu_custom_call.1} parent=0 // pred_check
    _
  $region11: #{tpu_custom_call.1} parent=0 // pred_check_branch
    %13 = sbr.rel (0) target = $region13
  $region12: #{tpu_custom_call.1} parent=0 // pred_region
    _
  $region13: #{tpu_custom_call.1} parent=0 // pred_fallthru
    _
  %v14 = vld [vmem:[%s2] sm:$0xff]
  %v15 = vld [vmem:[%s2 + $0x8] sm:$0xf]
  %v16 = vld [vmem:[%s0] sm:$0xff]
  %v17 = vld [vmem:[%s0 + $0x8] sm:$0xff]
  %v18 = vld [vmem:[%s0 + $0x10] sm:$0xff]
  %v19 = vld [vmem:[%s0 + $0x18] sm:$0xff]
  %v20 = vld [vmem:[%s0 + $0x20] sm:$0xf]
  %vm21 = vcmask 293888
  %v23 = vsel %vm21, %v14, 0
  %v26 = vsel %vm21, %v15, 0
  %vm28 = vcmask 1043456
  %v30 = vsel %vm28, %v20, 0
  %32 = vmatprep.subr.mxu0 0.0
  %33 = vmatpush1.msra.mxu0 %v16
  %34 = vmatprep.subr.mxu0 0.0
  %35 = vmatpush1.msra.mxu0 %v17
  %36 = vmatprep.subr.mxu0 0.0
  %37 = vmatpush1.msra.mxu0 %v18
  %38 = vmatprep.subr.mxu0 0.0
  %39 = vmatpush1.msra.mxu0 %v19
  %40 = vmatprep.subr.mxu0 0.0
  %41 = vmatpush1.msra.mxu0 %v30
  %42 = vmatprep.subr.mxu0 0.0
  %43 = vmatpush1.msra.mxu0 0.0
  %44 = vmatprep.subr.mxu0 0.0
  %45 = vmatpush1.msra.mxu0 0.0
  %46 = vmatprep.subr.mxu0 0.0
  %47 = vmatpush1.msra.mxu0 0.0
  %48 = vmatprep.subr.mxu0 0.0
  %49 = vmatpush1.msra.mxu0 0.0
  %50 = vmatprep.subr.mxu0 0.0
  %51 = vmatpush1.msra.mxu0 0.0
  %52 = vmatprep.subr.mxu0 0.0
  %53 = vmatpush1.msra.mxu0 0.0
  %54 = vmatprep.subr.mxu0 0.0
  %55 = vmatpush1.msra.mxu0 0.0
  %56 = vmatprep.subr.mxu0 0.0
  %57 = vmatpush1.msra.mxu0 0.0
  %58 = vmatprep.subr.mxu0 0.0
  %59 = vmatpush1.msra.mxu0 0.0
  %60 = vmatprep.subr.mxu0 0.0
  %61 = vmatpush1.msra.mxu0 0.0
  %62 = vmatprep.subr.mxu0 0.0
  %63 = vmatpush1.msra.mxu0 0.0
  %64 = vmatprep.subr.mxu0 0.0
  %65 = vmatpush1.msra.mxu0 0.0
  %66 = vmatprep.subr.mxu0 0.0
  %67 = vmatpush1.msra.mxu0 0.0
  %68 = vmatprep.subr.mxu0 0.0
  %69 = vmatpush1.msra.mxu0 0.0
  %70 = vmatprep.subr.mxu0 0.0
  %71 = vmatpush1.msra.mxu0 0.0
  %72 = vmatprep.subr.mxu0 0.0
  %73 = vmatpush1.msra.mxu0 0.0
  %74 = vmatprep.subr.mxu0 0.0
  %75 = vmatpush1.msra.mxu0 0.0
  %76 = vmatprep.subr.mxu0 0.0
  %77 = vmatpush1.msra.mxu0 0.0
  %78 = vmatprep.subr.mxu0 0.0
  %79 = vmatpush1.msra.mxu0 0.0
  %80 = vmatprep.subr.mxu0 0.0
  %81 = vmatpush1.msra.mxu0 0.0
  %82 = vmatprep.subr.mxu0 0.0
  %83 = vmatpush1.msra.mxu0 0.0
  %84 = vmatprep.subr.mxu0 0.0
  %85 = vmatpush1.msra.mxu0 0.0
  %86 = vmatprep.subr.mxu0 0.0
  %87 = vmatpush1.msra.mxu0 0.0
  %88 = vmatprep.subr.mxu0 0.0
  %89 = vmatpush1.msra.mxu0 0.0
  %90 = vmatprep.subr.mxu0 0.0
  %91 = vmatpush1.msra.mxu0 0.0
  %92 = vmatprep.subr.mxu0 0.0
  %93 = vmatpush1.msra.mxu0 0.0
  %94 = vmatprep.subr.mxu0 0.0
  %95 = vmatpush1.msra.mxu0 0.0
  %96 = vmatprep.mubr.f32.mxu0 0.0
  %97 = vmatmul.mubr.f32.gmra.mrb[0].mxu0 %v23
  %v98 = vpop.f32.mrb[0].mxu0
  %v99 = vadd.f32 0.0, %v98
  %v100 = vpop.f32.mrb[0].mxu0
  %101 = vmatprep.mubr.f32.mxu0 0.0
  %102 = vmatmul.mubr.f32.gmra.mrb[0].mxu0 %v26
  %v103 = vpop.f32.mrb[0].mxu0
  %v104 = vadd.f32 0.0, %v103
  %v105 = vpop.f32.mrb[0].mxu0
  %106 = vdwg.mxu0
  %vm107 = vcmask 261120
  %v108 = vsel %vm107, %v99, 0.0
  %109 = vadd.xlane.f32.xlu0 %v108
  %v110 = vpop.xlane.xlu0 %109
  %vm111 = vcmask 257024
  %v112 = vsel %vm111, %v104, 0.0
  %113 = vadd.xlane.f32.xlu0 %v112
  %v114 = vpop.xlane.xlu0 %113
  %v115 = vrcp.pop 32.0
  %v116 = vmul.f32 %v110, %v115
  %v117 = vmul.f32 %v114, %v115
  %v118 = vsub.f32 %v99, %v116
  %v119 = vsub.f32 %v104, %v117
  %v120 = vmul.f32 %v118, %v118
  %v121 = vmul.f32 %v119, %v119
  %v122 = vsel %vm107, %v120, 0.0
  %123 = vadd.xlane.f32.xlu0 %v122
  %v124 = vpop.xlane.xlu0 %123
  %v125 = vsel %vm111, %v121, 0.0
  %126 = vadd.xlane.f32.xlu0 %v125
  %v127 = vpop.xlane.xlu0 %126
  %v128 = vmul.f32 %v124, %v115
  %v129 = vmul.f32 %v127, %v115
  %v130 = vadd.f32 %v128, 1e-05
  %v131 = vadd.f32 %v129, 1e-05
  %v132 = vrsqrt.pop %v130
  %v133 = vrsqrt.pop %v131
  %v134 = vmul.f32 %v118, %v132
  %v135 = vmul.f32 %v119, %v133
  %v136 = vmax.f32 %v134, 0.0
  %v137 = vmax.f32 %v135, 0.0
  %v139 = vrot.slane %v136, 4
  %v141 = vadd.f32 %v136, %v139
  %v142 = vadd.f32 %v141, %v137
  %v144 = vrot.slane %v142, 4
  %v146 = vsel %vm28, %v142, %v144
  %v147 = vsub.f32 %v146, %v136
  %v148 = vsub.f32 %v142, %v137
  %v149 = vlaneseq
  %v150 = vshrl.u32 %v149, 7
  %v151 = vadd.s32 %v150, 8
  %v152 = vlaneseq
  %v153 = vand.u32 %v152, 127
  %v154 = vadd.s32 %v153, 128
  %v155 = vmul.u32 %v150, 16
  %v156 = vmul.u32 %v151, 16
  %vm157 = vcmp.ge.s32.totalorder %v153, %v155
  %vm158 = vcmp.ge.s32.totalorder %v154, %v155
  %vm159 = vcmp.ge.s32.totalorder %v153, %v156
  %vm160 = vcmp.ge.s32.totalorder %v154, %v156
  %v161 = vadd.s32 %v155, 16
  %v162 = vadd.s32 %v156, 16
  %vm163 = vcmp.lt.s32.totalorder %v153, %v161
  %vm164 = vcmp.lt.s32.totalorder %v154, %v161
  %vm165 = vcmp.lt.s32.totalorder %v153, %v162
  %vm166 = vcmp.lt.s32.totalorder %v154, %v162
  %vm167 = vmand %vm157, %vm163
  %vm168 = vmand %vm158, %vm164
  %vm169 = vmand %vm159, %vm165
  %vm170 = vmand %vm160, %vm166
  %v171 = vsel %vm167, 1.0, 0.0
  %v172 = vsel %vm168, 1.0, 0.0
  %v173 = vsel %vm169, 1.0, 0.0
  %v174 = vsel %vm170, 1.0, 0.0
  %v175 = vld [vmem:[%s1] sm:$0xff]
  %v176 = vld [vmem:[%s1 + $0x8] sm:$0xff]
  %v177 = vld [vmem:[%s1 + $0x10] sm:$0xf]
  %v178 = vld [vmem:[%s1 + $0x18] sm:$0xf]
  %s179 = scalar_lea.vmem %s1, 32
  %v180 = vld [vmem:[%s179] sm:$0xff]
  %v181 = vld [vmem:[%s179 + $0x8] sm:$0xff]
  %v182 = vld [vmem:[%s179 + $0x10] sm:$0xf]
  %v183 = vld [vmem:[%s179 + $0x18] sm:$0xf]
  %v184 = vadd.f32 %v175, %v176
  %185 = vadd.xlane.f32.xlu0 %v184
  %v186 = vpop.xlane.xlu0 %185
  %v187 = vsel %vm28, %v177, 0.0
  %v188 = vsel %vm28, %v178, 0.0
  %v189 = vadd.f32 %v187, %v188
  %190 = vadd.xlane.f32.xlu0 %v189
  %v191 = vpop.xlane.xlu0 %190
  %v192 = vadd.f32 %v186, 0.0
  %v193 = vadd.f32 %v191, 0.0
  %v194 = vadd.f32 %v180, %v181
  %195 = vadd.xlane.f32.xlu0 %v194
  %v196 = vpop.xlane.xlu0 %195
  %v197 = vsel %vm28, %v182, 0.0
  %v198 = vsel %vm28, %v183, 0.0
  %v199 = vadd.f32 %v197, %v198
  %200 = vadd.xlane.f32.xlu0 %v199
  %v201 = vpop.xlane.xlu0 %200
  %v202 = vadd.f32 %v192, %v196
  %v203 = vadd.f32 %v193, %v201
  %v204 = vrcp.pop 512.0
  %v205 = vmul.f32 %v202, %v204
  %v206 = vmul.f32 %v203, %v204
  %v207 = vsub.f32 %v175, %v205
  %v208 = vsub.f32 %v176, %v205
  %v209 = vsub.f32 %v177, %v206
  %v210 = vsub.f32 %v178, %v206
  %v211 = vmul.f32 %v207, %v207
  %v212 = vmul.f32 %v208, %v208
  %v213 = vmul.f32 %v209, %v209
  %v214 = vmul.f32 %v210, %v210
  %v215 = vadd.f32 %v211, %v212
  %216 = vadd.xlane.f32.xlu0 %v215
  %v217 = vpop.xlane.xlu0 %216
  %v218 = vsel %vm28, %v213, 0.0
  %v219 = vsel %vm28, %v214, 0.0
  %v220 = vadd.f32 %v218, %v219
  %221 = vadd.xlane.f32.xlu0 %v220
  %v222 = vpop.xlane.xlu0 %221
  %v223 = vadd.f32 %v217, 0.0
  %v224 = vadd.f32 %v222, 0.0
  %v225 = vsub.f32 %v180, %v205
  %v226 = vsub.f32 %v181, %v205
  %v227 = vsub.f32 %v182, %v206
  %v228 = vsub.f32 %v183, %v206
  %v229 = vmul.f32 %v225, %v225
  %v230 = vmul.f32 %v226, %v226
  %v231 = vmul.f32 %v227, %v227
  %v232 = vmul.f32 %v228, %v228
  %v233 = vadd.f32 %v229, %v230
  %234 = vadd.xlane.f32.xlu0 %v233
  %v235 = vpop.xlane.xlu0 %234
  %v236 = vsel %vm28, %v231, 0.0
  %v237 = vsel %vm28, %v232, 0.0
  %v238 = vadd.f32 %v236, %v237
  %239 = vadd.xlane.f32.xlu0 %v238
  %v240 = vpop.xlane.xlu0 %239
  %v241 = vadd.f32 %v223, %v235
  %v242 = vadd.f32 %v224, %v240
  %v243 = vmul.f32 %v241, %v204
  %v244 = vmul.f32 %v242, %v204
  %v245 = vadd.f32 %v243, 1e-05
  %v246 = vadd.f32 %v244, 1e-05
  %v247 = vrsqrt.pop %v245
  %v248 = vrsqrt.pop %v246
  %vm249 = vcmask 130048
  %v251 = vsel %vm249, %v147, 0
  %v254 = vsel %vm249, %v148, 0
  %256 = vmatprep.subr.mxu0 %v172
  %257 = vmatpush1.msra.mxu0 %v171
  %258 = vmatprep.subr.mxu0 %v174
  %259 = vmatpush1.msra.mxu0 %v173
  %260 = vmatprep.subr.mxu0 0.0
  %261 = vmatpush1.msra.mxu0 0.0
  %262 = vmatprep.subr.mxu0 0.0
  %263 = vmatpush1.msra.mxu0 0.0
  %264 = vmatprep.subr.mxu0 0.0
  %265 = vmatpush1.msra.mxu0 0.0
  %266 = vmatprep.subr.mxu0 0.0
  %267 = vmatpush1.msra.mxu0 0.0
  %268 = vmatprep.subr.mxu0 0.0
  %269 = vmatpush1.msra.mxu0 0.0
  %270 = vmatprep.subr.mxu0 0.0
  %271 = vmatpush1.msra.mxu0 0.0
  %272 = vmatprep.subr.mxu0 0.0
  %273 = vmatpush1.msra.mxu0 0.0
  %274 = vmatprep.subr.mxu0 0.0
  %275 = vmatpush1.msra.mxu0 0.0
  %276 = vmatprep.subr.mxu0 0.0
  %277 = vmatpush1.msra.mxu0 0.0
  %278 = vmatprep.subr.mxu0 0.0
  %279 = vmatpush1.msra.mxu0 0.0
  %280 = vmatprep.subr.mxu0 0.0
  %281 = vmatpush1.msra.mxu0 0.0
  %282 = vmatprep.subr.mxu0 0.0
  %283 = vmatpush1.msra.mxu0 0.0
  %284 = vmatprep.subr.mxu0 0.0
  %285 = vmatpush1.msra.mxu0 0.0
  %286 = vmatprep.subr.mxu0 0.0
  %287 = vmatpush1.msra.mxu0 0.0
  %288 = vmatprep.subr.mxu0 0.0
  %289 = vmatpush1.msra.mxu0 0.0
  %290 = vmatprep.subr.mxu0 0.0
  %291 = vmatpush1.msra.mxu0 0.0
  %292 = vmatprep.subr.mxu0 0.0
  %293 = vmatpush1.msra.mxu0 0.0
  %294 = vmatprep.subr.mxu0 0.0
  %295 = vmatpush1.msra.mxu0 0.0
  %296 = vmatprep.subr.mxu0 0.0
  %297 = vmatpush1.msra.mxu0 0.0
  %298 = vmatprep.subr.mxu0 0.0
  %299 = vmatpush1.msra.mxu0 0.0
  %300 = vmatprep.subr.mxu0 0.0
  %301 = vmatpush1.msra.mxu0 0.0
  %302 = vmatprep.subr.mxu0 0.0
  %303 = vmatpush1.msra.mxu0 0.0
  %304 = vmatprep.subr.mxu0 0.0
  %305 = vmatpush1.msra.mxu0 0.0
  %306 = vmatprep.subr.mxu0 0.0
  %307 = vmatpush1.msra.mxu0 0.0
  %308 = vmatprep.subr.mxu0 0.0
  %309 = vmatpush1.msra.mxu0 0.0
  %310 = vmatprep.subr.mxu0 0.0
  %311 = vmatpush1.msra.mxu0 0.0
  %312 = vmatprep.subr.mxu0 0.0
  %313 = vmatpush1.msra.mxu0 0.0
  %314 = vmatprep.subr.mxu0 0.0
  %315 = vmatpush1.msra.mxu0 0.0
  %316 = vmatprep.subr.mxu0 0.0
  %317 = vmatpush1.msra.mxu0 0.0
  %318 = vmatprep.subr.mxu0 0.0
  %319 = vmatpush1.msra.mxu0 0.0
  %320 = vmatprep.mubr.f32.mxu0 0.0
  %321 = vmatmul.mubr.f32.gmra.mrb[0].mxu0 %v251
  %v322 = vpop.f32.mrb[0].mxu0
  %v323 = vadd.f32 0.0, %v322
  %v324 = vpop.f32.mrb[0].mxu0
  %v325 = vadd.f32 0.0, %v324
  %326 = vmatprep.mubr.f32.mxu0 0.0
  %327 = vmatmul.mubr.f32.gmra.mrb[0].mxu0 %v254
  %v328 = vpop.f32.mrb[0].mxu0
  %v329 = vadd.f32 0.0, %v328
  %v330 = vpop.f32.mrb[0].mxu0
  %v331 = vadd.f32 0.0, %v330
  %332 = vdwg.mxu0
  %v333 = vmul.f32 %v207, %v247
  %v334 = vmul.f32 %v208, %v247
  %v335 = vmul.f32 %v209, %v248
  %v336 = vmul.f32 %v210, %v248
  %v337 = vmax.f32 %v333, 0.0
  %v338 = vmax.f32 %v334, 0.0
  %v339 = vmax.f32 %v335, 0.0
  %v340 = vmax.f32 %v336, 0.0
  %v341 = vadd.f32 %v337, %v323
  %v342 = vadd.f32 %v338, %v325
  %v343 = vadd.f32 %v339, %v329
  %v344 = vadd.f32 %v340, %v331
  %345 = vst [vmem:[%s3] sm:$0xff] %v341
  %346 = vst [vmem:[%s3 + $0x8] sm:$0xff] %v342
  %347 = vst [vmem:[%s3 + $0x10] sm:$0xf] %v343
  %348 = vst [vmem:[%s3 + $0x18] sm:$0xf] %v344
  %349 = vrot.lane.b32.xlu0 %v147, 112
  %v350 = vpop.permute.xlu0 %349
  %351 = vrot.lane.b32.xlu0 %v148, 112
  %v352 = vpop.permute.xlu0 %351
  %v353 = vsel %vm249, %v350, 0
  %v355 = vsel %vm249, %v352, 0
  %357 = vmatprep.subr.mxu0 %v172
  %358 = vmatpush1.msra.mxu0 %v171
  %359 = vmatprep.subr.mxu0 %v174
  %360 = vmatpush1.msra.mxu0 %v173
  %361 = vmatprep.subr.mxu0 0.0
  %362 = vmatpush1.msra.mxu0 0.0
  %363 = vmatprep.subr.mxu0 0.0
  %364 = vmatpush1.msra.mxu0 0.0
  %365 = vmatprep.subr.mxu0 0.0
  %366 = vmatpush1.msra.mxu0 0.0
  %367 = vmatprep.subr.mxu0 0.0
  %368 = vmatpush1.msra.mxu0 0.0
  %369 = vmatprep.subr.mxu0 0.0
  %370 = vmatpush1.msra.mxu0 0.0
  %371 = vmatprep.subr.mxu0 0.0
  %372 = vmatpush1.msra.mxu0 0.0
  %373 = vmatprep.subr.mxu0 0.0
  %374 = vmatpush1.msra.mxu0 0.0
  %375 = vmatprep.subr.mxu0 0.0
  %376 = vmatpush1.msra.mxu0 0.0
  %377 = vmatprep.subr.mxu0 0.0
  %378 = vmatpush1.msra.mxu0 0.0
  %379 = vmatprep.subr.mxu0 0.0
  %380 = vmatpush1.msra.mxu0 0.0
  %381 = vmatprep.subr.mxu0 0.0
  %382 = vmatpush1.msra.mxu0 0.0
  %383 = vmatprep.subr.mxu0 0.0
  %384 = vmatpush1.msra.mxu0 0.0
  %385 = vmatprep.subr.mxu0 0.0
  %386 = vmatpush1.msra.mxu0 0.0
  %387 = vmatprep.subr.mxu0 0.0
  %388 = vmatpush1.msra.mxu0 0.0
  %389 = vmatprep.subr.mxu0 0.0
  %390 = vmatpush1.msra.mxu0 0.0
  %391 = vmatprep.subr.mxu0 0.0
  %392 = vmatpush1.msra.mxu0 0.0
  %393 = vmatprep.subr.mxu0 0.0
  %394 = vmatpush1.msra.mxu0 0.0
  %395 = vmatprep.subr.mxu0 0.0
  %396 = vmatpush1.msra.mxu0 0.0
  %397 = vmatprep.subr.mxu0 0.0
  %398 = vmatpush1.msra.mxu0 0.0
  %399 = vmatprep.subr.mxu0 0.0
  %400 = vmatpush1.msra.mxu0 0.0
  %401 = vmatprep.subr.mxu0 0.0
  %402 = vmatpush1.msra.mxu0 0.0
  %403 = vmatprep.subr.mxu0 0.0
  %404 = vmatpush1.msra.mxu0 0.0
  %405 = vmatprep.subr.mxu0 0.0
  %406 = vmatpush1.msra.mxu0 0.0
  %407 = vmatprep.subr.mxu0 0.0
  %408 = vmatpush1.msra.mxu0 0.0
  %409 = vmatprep.subr.mxu0 0.0
  %410 = vmatpush1.msra.mxu0 0.0
  %411 = vmatprep.subr.mxu0 0.0
  %412 = vmatpush1.msra.mxu0 0.0
  %413 = vmatprep.subr.mxu0 0.0
  %414 = vmatpush1.msra.mxu0 0.0
  %415 = vmatprep.subr.mxu0 0.0
  %416 = vmatpush1.msra.mxu0 0.0
  %417 = vmatprep.subr.mxu0 0.0
  %418 = vmatpush1.msra.mxu0 0.0
  %419 = vmatprep.subr.mxu0 0.0
  %420 = vmatpush1.msra.mxu0 0.0
  %421 = vmatprep.mubr.f32.mxu0 0.0
  %422 = vmatmul.mubr.f32.gmra.mrb[0].mxu0 %v353
  %v423 = vpop.f32.mrb[0].mxu0
  %v424 = vadd.f32 0.0, %v423
  %v425 = vpop.f32.mrb[0].mxu0
  %v426 = vadd.f32 0.0, %v425
  %427 = vmatprep.mubr.f32.mxu0 0.0
  %428 = vmatmul.mubr.f32.gmra.mrb[0].mxu0 %v355
  %v429 = vpop.f32.mrb[0].mxu0
  %v430 = vadd.f32 0.0, %v429
  %v431 = vpop.f32.mrb[0].mxu0
  %v432 = vadd.f32 0.0, %v431
  %433 = vdwg.mxu0
  %v434 = vmul.f32 %v225, %v247
  %v435 = vmul.f32 %v226, %v247
  %v436 = vmul.f32 %v227, %v248
  %v437 = vmul.f32 %v228, %v248
  %v438 = vmax.f32 %v434, 0.0
  %v439 = vmax.f32 %v435, 0.0
  %v440 = vmax.f32 %v436, 0.0
  %v441 = vmax.f32 %v437, 0.0
  %v442 = vadd.f32 %v438, %v424
  %v443 = vadd.f32 %v439, %v426
  %v444 = vadd.f32 %v440, %v430
  %v445 = vadd.f32 %v441, %v432
  %s446 = scalar_lea.vmem %s3, 32
  %447 = vst [vmem:[%s446] sm:$0xff] %v442
  %448 = vst [vmem:[%s446 + $0x8] sm:$0xff] %v443
  %449 = vst [vmem:[%s446 + $0x10] sm:$0xf] %v444
  %450 = vst [vmem:[%s446 + $0x18] sm:$0xf] %v445
  // Predicated region
  $region14: #{tpu_custom_call.1} parent=0 // pred_check
    _
  $region15: #{tpu_custom_call.1} parent=0 // pred_check_branch
    %452 = sbr.rel (0) target = $region17
  $region16: #{tpu_custom_call.1} parent=0 // pred_region
    _
  $region17: #{tpu_custom_call.1} parent=0 // pred_fallthru
    _
  // Predicated region
  $region18: #{tpu_custom_call.1} parent=0 // pred_check
    _
  $region19: #{tpu_custom_call.1} parent=0 // pred_check_branch
    %454 = sbr.rel (0) target = $region21
  $region20: #{tpu_custom_call.1} parent=0 // pred_region
    _
  $region21: #{tpu_custom_call.1} parent=0 // pred_fallthru
    _

</llo_original>
